<compile_context>
chip_gen: v7x
topology: tpu7x:2x2x1
jax: 0.10.0
libtpu: 0.0.40
codegen_flags: <defaults>
</compile_context>

<pallas_src>
import functools

import jax
import jax.numpy as jnp
from jax.experimental import pallas as pl
from jax.experimental.pallas import tpu as pltpu

RSQRT2 = 2 ** (-0.5)


def _concat_pos_kernel(x_ref, pos_ref, o_ref, *, num_channels, embed_dim):
    # x_ref: (Bt, C, H*W), pos_ref: (E, H*W), o_ref: (Bt, C+E, H*W)
    bt = x_ref.shape[0]
    hw = x_ref.shape[2]
    # Pass-through of the input channels (pure copy).
    o_ref[:, :num_channels, :] = x_ref[...]
    # Broadcast the (already precomputed) positional embedding over batch.
    pos = pos_ref[...]
    o_ref[:, num_channels:num_channels + embed_dim, :] = jnp.broadcast_to(
        pos[None, :, :], (bt, embed_dim, hw)).astype(o_ref.dtype)


def _pick_batch_tile(batch, per_batch_bytes, target_bytes=1 << 20,
                     max_bytes=4 << 20):
    """Largest divisor of `batch` that keeps the per-step slab <= max_bytes,
    prefers >= target_bytes, and leaves >= 2 grid steps when batch >= 2."""
    if batch <= 1:
        return 1
    cap = max(1, batch // 2)  # keep >=2 parallel grid steps (v7x dual-TC)
    best = 1
    for bt in range(1, cap + 1):
        if batch % bt:
            continue
        if bt * per_batch_bytes > max_bytes:
            break
        best = bt
        if bt * per_batch_bytes >= target_bytes:
            break
    return best


def position_embedding_2d(x, height_embedding, width_embedding):
    """x: [B, C, H, W]; height_embedding: [E, H]; width_embedding: [E, W]."""
    B, C, H, W = x.shape
    E, He = height_embedding.shape
    Ew, Wd = width_embedding.shape
    assert He == H and Wd == W and Ew == E
    HW = H * W

    # Hoist the positional-embedding computation out of the kernel: it is only
    # E*H*W elements and would otherwise be recomputed (with an XLU relayout)
    # on every serial grid step.
    he = height_embedding.astype(jnp.float32)
    we = width_embedding.astype(jnp.float32)
    pos = ((he[:, :, None] + we[:, None, :]) * RSQRT2).astype(x.dtype)  # (E,H,W)
    pos_flat = pos.reshape(E, HW)

    # Lane-dense layout: last dim is H*W.
    x_flat = x.reshape(B, C, HW)

    itemsize = jnp.dtype(x.dtype).itemsize
    per_batch_bytes = (C + (C + E)) * HW * itemsize  # read x + write out
    Bt = _pick_batch_tile(B, per_batch_bytes)
    grid = (B // Bt,)

    kernel = functools.partial(_concat_pos_kernel, num_channels=C, embed_dim=E)

    out_flat = pl.pallas_call(
        kernel,
        out_shape=jax.ShapeDtypeStruct((B, C + E, HW), x.dtype),
        grid_spec=pl.GridSpec(
            grid=grid,
            in_specs=[
                pl.BlockSpec((Bt, C, HW), lambda b: (b, 0, 0)),
                # Constant index_map: pos stays resident, no re-DMA per step.
                pl.BlockSpec((E, HW), lambda b: (0, 0)),
            ],
            out_specs=pl.BlockSpec((Bt, C + E, HW), lambda b: (b, 0, 0)),
        ),
        compiler_params=pltpu.CompilerParams(
            dimension_semantics=("parallel",)),
    )(x_flat, pos_flat)

    return out_flat.reshape(B, C + E, H, W)


def position_embedding_2d_ref(x, height_embedding, width_embedding):
    # Pure-JAX reference mirroring the PyTorch forward.
    B = x.shape[0]
    E, H = height_embedding.shape
    _, W = width_embedding.shape
    he = height_embedding.reshape(1, E, H, 1)
    we = width_embedding.reshape(1, E, 1, W)
    pos = (he + we) * RSQRT2
    pos = jnp.broadcast_to(pos, (B, E, H, W))
    return jnp.concatenate([x, pos.astype(x.dtype)], axis=1)


if __name__ == "__main__":
    # Module parameters: embedding_dim=8, height=16, width=16
    B, C, H, W, E = 2, 4, 16, 16, 8

    key = jax.random.PRNGKey(0)
    kx, kh, kw = jax.random.split(key, 3)

    x = jax.random.normal(kx, (B, C, H, W), dtype=jnp.float32)
    # Deterministic "torch.randn"-like init of the parameters.
    height_embedding = jax.random.normal(kh, (E, H), dtype=jnp.float32)
    width_embedding = jax.random.normal(kw, (E, W), dtype=jnp.float32)

    out = position_embedding_2d(x, height_embedding, width_embedding)
    out = jax.block_until_ready(out)

    ref = position_embedding_2d_ref(x, height_embedding, width_embedding)
    assert out.shape == (B, C + E, H, W), out.shape
    assert jnp.allclose(out, ref, atol=1e-6, rtol=1e-6), "mismatch vs reference"

    print("KERNEL_OK")
</pallas_src>

<mosaic_0001>
module attributes {stable_mosaic.version = 11 : i64} {
  func.func @_concat_pos_kernel(%arg0: i32, %arg1: memref<1x4x256xf32, #tpu.memory_space<vmem>>, %arg2: memref<8x256xf32, #tpu.memory_space<vmem>>, %arg3: memref<1x12x256xf32, #tpu.memory_space<vmem>>) attributes {dimension_semantics = [#tpu.dimension_semantics<parallel>], iteration_bounds = array<i64: 2>, scalar_prefetch = 0 : i64, scratch_operands = 0 : i64, tpu.core_type = #tpu.core_type<tc>, window_params = [{transform_indices = @transform_0, window_bounds = array<i64: 1, 4, 256>}, {pipeline_mode = #tpu.pipeline_mode<synchronous>, transform_indices = @transform_1, window_bounds = array<i64: 8, 256>}, {transform_indices = @transform_2, window_bounds = array<i64: 1, 12, 256>}]} {
    %c0 = arith.constant 0 : index
    %c0_0 = arith.constant 0 : index
    %c0_1 = arith.constant 0 : index
    %0 = vector.load %arg1[%c0, %c0_0, %c0_1] : memref<1x4x256xf32, #tpu.memory_space<vmem>>, vector<1x4x256xf32>
    %c0_2 = arith.constant 0 : index
    %c0_3 = arith.constant 0 : index
    %c0_4 = arith.constant 0 : index
    %1 = vector.load %arg3[%c0_2, %c0_3, %c0_4] : memref<1x12x256xf32, #tpu.memory_space<vmem>>, vector<1x4x256xf32>
    tpu.vector_store %arg3[%c0_2, %c0_3, %c0_4], %0 {strides = array<i32>} : memref<1x12x256xf32, #tpu.memory_space<vmem>>, vector<1x4x256xf32>,
    %c0_5 = arith.constant 0 : index
    %c0_6 = arith.constant 0 : index
    %2 = vector.load %arg2[%c0_5, %c0_6] : memref<8x256xf32, #tpu.memory_space<vmem>>, vector<8x256xf32>
    %3 = vector.shape_cast %2 : vector<8x256xf32> to vector<1x8x256xf32>
    %c0_7 = arith.constant 0 : index
    %c4 = arith.constant 4 : index
    %c0_8 = arith.constant 0 : index
    %4 = vector.load %arg3[%c0_7, %c4, %c0_8] : memref<1x12x256xf32, #tpu.memory_space<vmem>>, vector<1x8x256xf32>
    tpu.vector_store %arg3[%c0_7, %c4, %c0_8], %3 {strides = array<i32>} : memref<1x12x256xf32, #tpu.memory_space<vmem>>, vector<1x8x256xf32>,
    return
  }
  func.func @transform_0(%arg0: i32) -> (i32, i32, i32) {
    %c0_i32 = arith.constant 0 : i32
    %c0_i32_0 = arith.constant 0 : i32
    %c0_i32_1 = arith.constant 0 : i32
    return %arg0, %c0_i32, %c0_i32_0 : i32, i32, i32
  }
  func.func @transform_1(%arg0: i32) -> (i32, i32) {
    %c0_i32 = arith.constant 0 : i32
    %c0_i32_0 = arith.constant 0 : i32
    %c0_i32_1 = arith.constant 0 : i32
    return %c0_i32, %c0_i32_0 : i32, i32
  }
  func.func @transform_2(%arg0: i32) -> (i32, i32, i32) {
    %c0_i32 = arith.constant 0 : i32
    %c0_i32_0 = arith.constant 0 : i32
    %c0_i32_1 = arith.constant 0 : i32
    return %arg0, %c0_i32, %c0_i32_0 : i32, i32, i32
  }
}

</mosaic_0001>

<llo_original>
// kernel: tpu_custom_call.1
$region0: #{tpu_custom_call.1}
  #allocation0 [shape = 'u32[]', space=smem, size = 0x4, offset = 0x4, fixed_abs, tag = 'smem constant byte address 0x4 - core index']
  #allocation1 [shape = 'u32[144,128]{1,0:T(1,128)}', space=vmem, size = 0x12000, scoped, tag = 'internal scratch']
  %s0 = inlined_call_operand.hbm [shape: f32[2,4,256], index: 0, kind: input, shape index: {}]
  %s1 = inlined_call_operand.hbm [shape: f32[8,256], index: 1, kind: input, shape index: {}]
  %s2 = inlined_call_operand.vmem [shape: f32[2,12,256], index: 2, kind: output, shape index: {}]
  %s3 = sld [smem:[#allocation0]]
  $region49: #{tpu_custom_call.1} parent=0
    _
  %s5 = ssub.s32 1, %s3
  %s6 = scalar_select 0, %s5, %s3
  $region1: #{tpu_custom_call.1} parent=0
    #allocation2 [shape = 'u8[8192]{0}', space=vmem, size = 0x2000, scoped, tag = 'input window, operand 0']
    #allocation3 [shape = 's32[2]{0}', space=sflag, size = 0x8, scoped, tag = 'scoped memory for tpu_custom_call.1']
    #allocation4 [shape = 'u8[8192]{0}', space=vmem, size = 0x2000, scoped, tag = 'input window, operand 1, single buffered']
    #allocation5 [shape = 's32[1]{0}', space=sflag, size = 0x4, scoped, tag = 'scoped memory for tpu_custom_call.1']
    %7 = vsyncpa [#allocation3], 0
    %s8 = scalar_lea.sflag [#allocation3], 1
    %9 = vsyncpa %s8, 0
    %10 = vsyncpa [#allocation5], 0
    loop: start=0, step=1, limit=4
    $region2: #{tpu_custom_call.1} parent=1 // loop_pre_header
      _
    $region3: #{tpu_custom_call.1} parent=1 // loop_header
      %s12 = sphi 0, %s16
      %p13 = scmp.ge.s32.totalorder %s12, 4
      %s22 = sphi 0, %s24
      %s25 = sphi 0, %s22
      %s26 = sphi 0, %s25
      %s42 = sphi 0, %s26
      %s46 = sphi 0, %s46
      %s48 = sphi 0, %s46
      %s49 = sphi 0, %s48
      %s63 = sphi 0, %s49
      %s69 = sphi 0, %s71
      %s72 = sphi 0, %s69
      %s73 = sphi 0, %s72
      %s89 = sphi 0, %s73
    $region4: #{tpu_custom_call.1} parent=1 // loop_header_branch
      %15 = sbr.rel (%p13) target = $region8
    $region5: #{tpu_custom_call.1} parent=1 // loop_body
      %s17 = ssub.s32 %s12, 1
      %s18 = ssub.s32 %s12, 2
      %s19 = sadd.s32 %s12, 1
      %s20 = ssub.s32 %s12, %s19
      %p21 = scmp.eq.s32.totalorder %s20, 0
      %s23 = sadd.s32 %s22, 1
      %s24 = scalar_select %p21, %s22, %s23
      %p27 = pneg %p21
      %p28 = scmp.eq.s32.totalorder %s12, 1
      %p29 = por %p27, %p28
      %p30 = scmp.ne.s32.totalorder %s22, %s25
      %p31 = scmp.eq.s32.totalorder %s12, 0
      %p32 = por %p30, %p31
      %p33 = scmp.ne.s32.totalorder %s22, %s25
      %p34 = scmp.eq.s32.totalorder %s17, 1
      %p35 = por %p33, %p34
      %p36 = scmp.ne.s32.totalorder %s25, %s26
      %p37 = scmp.eq.s32.totalorder %s17, 0
      %p38 = por %p36, %p37
      %p39 = scmp.ne.s32.totalorder %s25, %s26
      %p40 = scmp.eq.s32.totalorder %s18, 1
      %p41 = por %p39, %p40
      %p43 = scmp.ne.s32.totalorder %s26, %s42
      %p44 = scmp.eq.s32.totalorder %s18, 0
      %p45 = por %p43, %p44
      %s47 = sadd.s32 %s46, 1
      %p50 = scmp.eq.s32.totalorder %s12, 1
      %p51 = scmp.ne.s32.totalorder %s46, %s48
      %p52 = scmp.eq.s32.totalorder %s12, 0
      %p53 = por %p51, %p52
      %p54 = scmp.ne.s32.totalorder %s46, %s48
      %p55 = scmp.eq.s32.totalorder %s17, 1
      %p56 = por %p54, %p55
      %p57 = scmp.ne.s32.totalorder %s48, %s49
      %p58 = scmp.eq.s32.totalorder %s17, 0
      %p59 = por %p57, %p58
      %p60 = scmp.ne.s32.totalorder %s48, %s49
      %p61 = scmp.eq.s32.totalorder %s18, 1
      %p62 = por %p60, %p61
      %p64 = scmp.ne.s32.totalorder %s49, %s63
      %p65 = scmp.eq.s32.totalorder %s18, 0
      %p66 = por %p64, %p65
      %s67 = ssub.s32 %s12, %s19
      %p68 = scmp.eq.s32.totalorder %s67, 0
      %s70 = sadd.s32 %s69, 1
      %s71 = scalar_select %p68, %s69, %s70
      %p74 = pneg %p68
      %p75 = scmp.eq.s32.totalorder %s12, 1
      %p76 = por %p74, %p75
      %p77 = scmp.ne.s32.totalorder %s69, %s72
      %p78 = scmp.eq.s32.totalorder %s12, 0
      %p79 = por %p77, %p78
      %p80 = scmp.ne.s32.totalorder %s69, %s72
      %p81 = scmp.eq.s32.totalorder %s17, 1
      %p82 = por %p80, %p81
      %p83 = scmp.ne.s32.totalorder %s72, %s73
      %p84 = scmp.eq.s32.totalorder %s17, 0
      %p85 = por %p83, %p84
      %p86 = scmp.ne.s32.totalorder %s72, %s73
      %p87 = scmp.eq.s32.totalorder %s18, 1
      %p88 = por %p86, %p87
      %p90 = scmp.ne.s32.totalorder %s73, %s89
      %p91 = scmp.eq.s32.totalorder %s18, 0
      %p92 = por %p90, %p91
      %p93 = scmp.le.s32.totalorder 1, %s12
      %p94 = scmp.lt.s32.totalorder %s12, 3
      %p95 = pnand %p93, %p94
      %p96 = pneg %p95
      // Predicated region
      $region9: #{tpu_custom_call.1} parent=5 // pred_check
        _
      $region10: #{tpu_custom_call.1} parent=5 // pred_check_branch
        %98 = sbr.rel (%p95) target = $region12
      $region11: #{tpu_custom_call.1} parent=5 // pred_region
        %s99 = ssub.s32 %s12, 1
        // Predicated region
        $region13: #{tpu_custom_call.1} parent=11 // pred_check
          %p100 = pneg %p59
        $region14: #{tpu_custom_call.1} parent=11 // pred_check_branch
          %102 = sbr.rel (%p100) target = $region16
        $region15: #{tpu_custom_call.1} parent=11 // pred_region
          %s104 = ssub.s32 256, 256
          %105 = vsyncadd [#allocation5], %s104
          %s107 = sshll.u32 [#allocation4], 4
          %s108 = int_to_ptr.vmem [resolvable:$true] %s107
          %110 = dma.hbm_to_vmem [thread:$0]  %s1, 256, %s108, [#allocation5]
        $region16: #{tpu_custom_call.1} parent=11 // pred_fallthru
          _
      $region12: #{tpu_custom_call.1} parent=5 // pred_fallthru
        _
      %p111 = scmp.lt.s32.totalorder %s12, 2
      // Predicated region
      $region17: #{tpu_custom_call.1} parent=5 // pred_check
        %p112 = pneg %p111
      $region18: #{tpu_custom_call.1} parent=5 // pred_check_branch
        %114 = sbr.rel (%p112) target = $region20
      $region19: #{tpu_custom_call.1} parent=5 // pred_region
        // Predicated region
        $region21: #{tpu_custom_call.1} parent=19 // pred_check
          %p115 = pneg %p32
        $region22: #{tpu_custom_call.1} parent=19 // pred_check_branch
          %117 = sbr.rel (%p115) target = $region24
        $region23: #{tpu_custom_call.1} parent=19 // pred_region
          %s118 = sand.u32 %s22, 1
          %s119 = scalar_lea.sflag [#allocation3], %s118
          %s120 = sand.u32 %s22, 1
          %s121 = smul.addr %s120, 8
          %s122 = scalar_lea.vmem [#allocation2], %s121
          %s124 = ssub.s32 128, 128
          %125 = vsyncadd %s119, %s124
          %s126 = smul.addr %s12, 2
          %s127 = smul.addr %s126, 64
          %s128 = scalar_lea.hbm %s0, %s127
          %s130 = sshll.u32 %s122, 4
          %s131 = int_to_ptr.vmem [resolvable:$true] %s130
          %133 = dma.hbm_to_vmem [thread:$0]  %s128, 128, %s131, %s119
        $region24: #{tpu_custom_call.1} parent=19 // pred_fallthru
          _
      $region20: #{tpu_custom_call.1} parent=5 // pred_fallthru
        _
      %p134 = scmp.le.s32.totalorder 1, %s12
      %p135 = scmp.lt.s32.totalorder %s12, 3
      %p136 = pnand %p134, %p135
      %p137 = pneg %p136
      // Predicated region
      $region25: #{tpu_custom_call.1} parent=5 // pred_check
        _
      $region26: #{tpu_custom_call.1} parent=5 // pred_check_branch
        %139 = sbr.rel (%p136) target = $region28
      $region27: #{tpu_custom_call.1} parent=5 // pred_region
        %s140 = ssub.s32 %s12, 1
        %s141 = sand.u32 %s25, 1
        %s142 = scalar_lea.sflag [#allocation3], %s141
        %s143 = sand.u32 %s25, 1
        %s144 = smul.addr %s143, 8
        %s145 = scalar_lea.vmem [#allocation2], %s144
        // Predicated region
        $region29: #{tpu_custom_call.1} parent=27 // pred_check
          %p146 = pneg %p38
        $region30: #{tpu_custom_call.1} parent=27 // pred_check_branch
          %148 = sbr.rel (%p146) target = $region32
        $region31: #{tpu_custom_call.1} parent=27 // pred_region
          %149 = dma.done %s142, 128
        $region32: #{tpu_custom_call.1} parent=27 // pred_fallthru
          _
        // Predicated region
        $region33: #{tpu_custom_call.1} parent=27 // pred_check
          %p150 = pneg %p59
        $region34: #{tpu_custom_call.1} parent=27 // pred_check_branch
          %152 = sbr.rel (%p150) target = $region36
        $region35: #{tpu_custom_call.1} parent=27 // pred_region
          %153 = dma.done [#allocation5], 256
        $region36: #{tpu_custom_call.1} parent=27 // pred_fallthru
          _
        %s154 = sand.u32 %s25, 1
        %s155 = scalar_lea.sflag [#allocation3], %s154
        %s156 = sand.u32 %s25, 1
        %s157 = smul.addr %s156, 8
        %s158 = scalar_lea.vmem [#allocation2], %s157
        %p159 = pneg %p38
        %p160 = pneg %p35
        %p161 = pneg %p59
        %p162 = pneg %p56
        %p163 = pneg %p85
        %p164 = pneg %p82
        %p165 = scmp.lt.s32.totalorder %s17, 1
        %s166 = scalar_select %p165, %s17, 1
        %s167 = smul.addr %s166, 4
        %s168 = smul.addr %s167, 8
        %s169 = scalar_lea.vmem %s2, %s168
        %p170 = scmp.lt.s32.totalorder %s17, 1
        %s171 = scalar_select %p170, %s17, 1
        %s172 = smul.addr %s171, 4
        %s173 = smul.addr %s172, 8
        %s174 = scalar_lea.vmem %s2, %s173
        %v175 = vld [vmem:[%s145] sm:$0xff]
        %v177 = vcombine.high %v175, %v175
        %179 = vst [vmem:[%s174] sm:$0xf] %v175
        %180 = vst [vmem:[%s174 + $0x8] sm:$0xf] %v177
        %v181 = vld [vmem:[#allocation4] sm:$0xff]
        %v182 = vld [vmem:[#allocation4 + $0x8] sm:$0xff]
        %v185 = vrot.slane %v181, 4
        %v186 = vrot.slane %v182, 4
        %189 = vst [vmem:[%s174] sm:$0xf0] %v185
        %190 = vst [vmem:[%s174 + $0x8] sm:$0xf0] %v186
        %191 = vst [vmem:[%s174 + $0x10] sm:$0xf] %v185
        %192 = vst [vmem:[%s174 + $0x18] sm:$0xf] %v186
        %p193 = scmp.lt.s32.totalorder %s17, 1
        %s194 = scalar_select %p193, %s17, 1
        %s195 = smul.addr %s194, 4
        %s196 = smul.addr %s195, 8
        %s197 = scalar_lea.vmem %s2, %s196
        // Predicated region
        $region37: #{tpu_custom_call.1} parent=27 // pred_check
          %p198 = pneg %p82
        $region38: #{tpu_custom_call.1} parent=27 // pred_check_branch
          %200 = sbr.rel (%p198) target = $region40
        $region39: #{tpu_custom_call.1} parent=27 // pred_region
          _
        $region40: #{tpu_custom_call.1} parent=27 // pred_fallthru
          _
      $region28: #{tpu_custom_call.1} parent=5 // pred_fallthru
        _
      %p201 = scmp.le.s32.totalorder 2, %s12
      // Predicated region
      $region41: #{tpu_custom_call.1} parent=5 // pred_check
        %p202 = pneg %p201
      $region42: #{tpu_custom_call.1} parent=5 // pred_check_branch
        %204 = sbr.rel (%p202) target = $region44
      $region43: #{tpu_custom_call.1} parent=5 // pred_region
        %s205 = ssub.s32 %s12, 2
        // Predicated region
        $region45: #{tpu_custom_call.1} parent=43 // pred_check
          %p206 = pneg %p88
        $region46: #{tpu_custom_call.1} parent=43 // pred_check_branch
          %208 = sbr.rel (%p206) target = $region48
        $region47: #{tpu_custom_call.1} parent=43 // pred_region
          %p209 = scmp.lt.s32.totalorder %s18, 1
          %s210 = scalar_select %p209, %s18, 1
          %s211 = smul.addr %s210, 4
          %s212 = smul.addr %s211, 8
          %s213 = scalar_lea.vmem %s2, %s212
        $region48: #{tpu_custom_call.1} parent=43 // pred_fallthru
          _
      $region44: #{tpu_custom_call.1} parent=5 // pred_fallthru
        _
    $region6: #{tpu_custom_call.1} parent=1 // loop_footer
      %s16 = sadd.s32 1, %s12
    $region7: #{tpu_custom_call.1} parent=1 // loop_footer_branch
      %11 = sbr.rel target = $region3
    $region8: #{tpu_custom_call.1} parent=1 // loop_exit
      _
    %214 = vsyncpa [#allocation3], 1
    %s215 = scalar_lea.sflag [#allocation3], 1
    %216 = vsyncpa %s215, 1
    %217 = vsyncpa [#allocation5], 1

</llo_original>
